<compile_context>
chip_gen: v7x
topology: tpu7x:2x2x1
jax: 0.10.0
libtpu: 0.0.40
codegen_flags: <defaults>
</compile_context>

<pallas_src>
import jax
import jax.numpy as jnp
from jax.experimental import pallas as pl
from jax.experimental.pallas import tpu as pltpu


def _round_up(x: int, m: int) -> int:
    return ((x + m - 1) // m) * m


def _pick_tile(dim: int, unit: int, cap: int):
    """Pick (tile, padded_dim): tile is a multiple of `unit`, divides padded_dim,
    and padding beyond rounding to `unit` is avoided whenever possible."""
    dr = _round_up(dim, unit)
    cap = max(unit, (cap // unit) * unit)
    if dr <= cap:
        return dr, dr                      # whole (rounded) dim in one tile
    best = unit
    t = unit
    while t <= cap:                        # largest multiple-of-unit divisor <= cap
        if dr % t == 0:
            best = t
        t += unit
    if best >= cap // 2:
        return best, dr                    # good divisor: no extra padding
    return cap, _round_up(dr, cap)         # awkward factorization: pad to cap


# ----------------------------- kernel bodies --------------------------------

def _mm_kernel(a_ref, b_ref, o_ref):
    # Single K tile, bb == 1 (batch dim squeezed): canonical 2-D MXU matmul.
    o_ref[...] = jnp.dot(
        a_ref[...], b_ref[...], preferred_element_type=jnp.float32
    ).astype(o_ref.dtype)


def _mm_kernel_acc(a_ref, b_ref, o_ref, acc_ref):
    # Multiple K tiles, bb == 1: resident f32 accumulator over the K axis.
    k = pl.program_id(3)

    @pl.when(k == 0)
    def _():
        acc_ref[...] = jnp.zeros_like(acc_ref)

    acc_ref[...] += jnp.dot(
        a_ref[...], b_ref[...], preferred_element_type=jnp.float32
    )

    @pl.when(k == pl.num_programs(3) - 1)
    def _():
        o_ref[...] = acc_ref[...].astype(o_ref.dtype)


def _bmm_kernel(a_ref, b_ref, o_ref):
    # Single K tile, bb > 1 small batches packed per step.
    o_ref[...] = jnp.einsum(
        "bmk,bkn->bmn", a_ref[...], b_ref[...],
        preferred_element_type=jnp.float32,
    ).astype(o_ref.dtype)


def _bmm_kernel_acc(a_ref, b_ref, o_ref, acc_ref):
    k = pl.program_id(3)

    @pl.when(k == 0)
    def _():
        acc_ref[...] = jnp.zeros_like(acc_ref)

    acc_ref[...] += jnp.einsum(
        "bmk,bkn->bmn", a_ref[...], b_ref[...],
        preferred_element_type=jnp.float32,
    )

    @pl.when(k == pl.num_programs(3) - 1)
    def _():
        o_ref[...] = acc_ref[...].astype(o_ref.dtype)


# ------------------------------- wrapper -------------------------------------

def batched_matmul(A: jax.Array, B: jax.Array) -> jax.Array:
    """C[b] = A[b] @ B[b] via a tiled Pallas TPU kernel."""
    batch, M, K = A.shape
    batch_b, K_b, N = B.shape
    assert batch == batch_b and K == K_b, "shape mismatch"
    out_dtype = jnp.float32

    # ---- generation-aware VMEM budget ---------------------------------------
    try:
        vmem_cap = int(pltpu.get_tpu_info().vmem_capacity_bytes)
    except Exception:
        vmem_cap = 64 * 1024 * 1024          # v7x-safe fallback
    vmem_limit = min(int(vmem_cap * 0.75), 100 * 1024 * 1024)
    tile_budget = max(8 * 1024 * 1024, vmem_limit - 4 * 1024 * 1024)

    Mr = _round_up(M, 8)

    # Pack a few small batches per grid step only to amortize the ~0.35 us
    # per-step overhead (it does not improve MXU row utilization).
    if Mr <= 64 and batch % 4 == 0:
        bb = 4
    elif Mr <= 128 and batch % 2 == 0:
        bb = 2
    else:
        bb = 1
    bb = max(1, min(bb, batch))

    # ---- tile sizes (lane-dense; minimize host-side padding) ----------------
    tm_cap = 512
    tn_cap = 512 if Mr > 128 else 1024
    tm, Mp = _pick_tile(M, 8, tm_cap)
    tn, Np = _pick_tile(N, 128, tn_cap)

    # Guarantee >= 2 parallel blocks (v7x has 2 TensorCores per chip).
    def _nblocks():
        return (batch // bb) * (Mp // tm) * (Np // tn)

    while _nblocks() < 2:
        if bb > 1:
            bb //= 2
        elif Np // tn == 1 and tn % 256 == 0:
            tn //= 2
        elif Mp // tm == 1 and tm % 16 == 0:
            tm //= 2
        else:
            break

    # K depth: as deep as the per-step footprint allows (double-buffered A/B/C
    # tiles + f32 accumulator), ideally all of K so the reduction axis and the
    # accumulator disappear entirely.
    avail_words = tile_budget // (4 * bb) - 3 * tm * tn
    tk_cap = max(128, min(4096, (avail_words // (2 * (tm + tn))) // 128 * 128))
    tk, Kp = _pick_tile(K, 128, tk_cap)

    # ---- pad (zero padding is exact for matmul) ------------------------------
    if (Mp, Kp) != (M, K):
        A = jnp.pad(A, ((0, 0), (0, Mp - M), (0, Kp - K)))
    if (Kp, Np) != (K, N):
        B = jnp.pad(B, ((0, 0), (0, Kp - K), (0, Np - N)))

    single_k = (Kp == tk)
    n_k = Kp // tk

    if bb == 1:
        a_shape = (pl.Squeezed(), tm, tk)
        b_shape = (pl.Squeezed(), tk, tn)
        o_shape = (pl.Squeezed(), tm, tn)
        acc_shape = (tm, tn)
    else:
        a_shape = (bb, tm, tk)
        b_shape = (bb, tk, tn)
        o_shape = (bb, tm, tn)
        acc_shape = (bb, tm, tn)

    if single_k:
        grid = (batch // bb, Mp // tm, Np // tn)
        in_specs = [
            pl.BlockSpec(a_shape, lambda b, i, j: (b, i, 0)),
            pl.BlockSpec(b_shape, lambda b, i, j: (b, 0, j)),
        ]
        out_specs = pl.BlockSpec(o_shape, lambda b, i, j: (b, i, j))
        scratch_shapes = []
        kernel = _mm_kernel if bb == 1 else _bmm_kernel
        semantics = ("parallel", "parallel", "parallel")
    else:
        grid = (batch // bb, Mp // tm, Np // tn, n_k)
        in_specs = [
            pl.BlockSpec(a_shape, lambda b, i, j, k: (b, i, k)),
            pl.BlockSpec(b_shape, lambda b, i, j, k: (b, k, j)),
        ]
        # Same (b, i, j) output block across k -> tile stays resident over the
        # reduction and is stored once at k == last.
        out_specs = pl.BlockSpec(o_shape, lambda b, i, j, k: (b, i, j))
        scratch_shapes = [pltpu.VMEM(acc_shape, jnp.float32)]
        kernel = _mm_kernel_acc if bb == 1 else _bmm_kernel_acc
        semantics = ("parallel", "parallel", "parallel", "arbitrary")

    grid_spec = pltpu.PrefetchScalarGridSpec(
        num_scalar_prefetch=0,
        grid=grid,
        in_specs=in_specs,
        out_specs=out_specs,
        scratch_shapes=scratch_shapes,
    )

    cost = pl.CostEstimate(
        flops=2 * batch * M * N * K,
        transcendentals=0,
        bytes_accessed=4 * (batch * M * K + batch * K * N + batch * M * N),
    )

    C = pl.pallas_call(
        kernel,
        out_shape=jax.ShapeDtypeStruct((batch, Mp, Np), out_dtype),
        grid_spec=grid_spec,
        compiler_params=pltpu.CompilerParams(
            dimension_semantics=semantics,
            vmem_limit_bytes=vmem_limit,
        ),
        cost_estimate=cost,
    )(A, B)

    if (Mp, Np) != (M, N):
        C = C[:, :M, :N]
    return C


if __name__ == "__main__":
    key = jax.random.PRNGKey(0)
    k_a, k_b = jax.random.split(key)

    batch, M, K, N = 2, 64, 128, 128
    A = jax.random.normal(k_a, (batch, M, K), dtype=jnp.float32)
    B = jax.random.normal(k_b, (batch, K, N), dtype=jnp.float32)

    C = batched_matmul(A, B)
    jax.block_until_ready(C)

    # Correctness check vs plain JAX reference.
    C_ref = jnp.einsum("bmk,bkn->bmn", A, B)
    assert C.shape == (batch, M, N)
    assert jnp.allclose(C, C_ref, atol=1e-4, rtol=1e-4)

    print("KERNEL_OK")
</pallas_src>

<mosaic_0001>
module attributes {stable_mosaic.version = 11 : i64} {
  func.func @_mm_kernel(%arg0: i32, %arg1: i32, %arg2: i32, %arg3: memref<1x64x128xf32, #tpu.memory_space<vmem>>, %arg4: memref<1x128x128xf32, #tpu.memory_space<vmem>>, %arg5: memref<1x64x128xf32, #tpu.memory_space<vmem>>) attributes {dimension_semantics = [#tpu.dimension_semantics<parallel>, #tpu.dimension_semantics<parallel>, #tpu.dimension_semantics<parallel>], iteration_bounds = array<i64: 2, 1, 1>, scalar_prefetch = 0 : i64, scratch_operands = 0 : i64, tpu.core_type = #tpu.core_type<tc>, window_params = [{transform_indices = @transform_0, window_bounds = array<i64: 1, 64, 128>}, {transform_indices = @transform_1, window_bounds = array<i64: 1, 128, 128>}, {transform_indices = @transform_2, window_bounds = array<i64: 1, 64, 128>}]} {
    %c0 = arith.constant 0 : index
    %c0_0 = arith.constant 0 : index
    %c0_1 = arith.constant 0 : index
    %0 = vector.load %arg3[%c0, %c0_0, %c0_1] : memref<1x64x128xf32, #tpu.memory_space<vmem>>, vector<1x64x128xf32>
    %1 = vector.shape_cast %0 : vector<1x64x128xf32> to vector<64x128xf32>
    %c0_2 = arith.constant 0 : index
    %c0_3 = arith.constant 0 : index
    %c0_4 = arith.constant 0 : index
    %2 = vector.load %arg4[%c0_2, %c0_3, %c0_4] : memref<1x128x128xf32, #tpu.memory_space<vmem>>, vector<1x128x128xf32>
    %3 = vector.shape_cast %2 : vector<1x128x128xf32> to vector<128x128xf32>
    %cst = arith.constant dense<0.000000e+00> : vector<64x128xf32>
    %4 = tpu.matmul %1, %3, %cst {dimension_numbers = #tpu.dot_dimension_numbers<[1], [0], [0], [1], [0, 0, 1, 1], [], []>} : vector<64x128xf32>, vector<128x128xf32>, vector<64x128xf32> -> vector<64x128xf32>
    %c0_5 = arith.constant 0 : index
    %c0_6 = arith.constant 0 : index
    %c0_7 = arith.constant 0 : index
    %5 = vector.load %arg5[%c0_5, %c0_6, %c0_7] : memref<1x64x128xf32, #tpu.memory_space<vmem>>, vector<1x64x128xf32>
    %6 = vector.shape_cast %5 : vector<1x64x128xf32> to vector<64x128xf32>
    %7 = vector.shape_cast %4 : vector<64x128xf32> to vector<1x64x128xf32>
    tpu.vector_store %arg5[%c0_5, %c0_6, %c0_7], %7 {strides = array<i32>} : memref<1x64x128xf32, #tpu.memory_space<vmem>>, vector<1x64x128xf32>,
    return
  }
  func.func @transform_0(%arg0: i32, %arg1: i32, %arg2: i32) -> (i32, i32, i32) {
    %c0_i32 = arith.constant 0 : i32
    %c0_i32_0 = arith.constant 0 : i32
    return %arg0, %arg1, %c0_i32 : i32, i32, i32
  }
  func.func @transform_1(%arg0: i32, %arg1: i32, %arg2: i32) -> (i32, i32, i32) {
    %c0_i32 = arith.constant 0 : i32
    %c0_i32_0 = arith.constant 0 : i32
    return %arg0, %c0_i32, %arg2 : i32, i32, i32
  }
  func.func @transform_2(%arg0: i32, %arg1: i32, %arg2: i32) -> (i32, i32, i32) {
    %c0_i32 = arith.constant 0 : i32
    return %arg0, %arg1, %arg2 : i32, i32, i32
  }
}

</mosaic_0001>

<llo_original>
// kernel: tpu_custom_call.1
$region0: #{tpu_custom_call.1}
  #allocation0 [shape = 'u32[]', space=smem, size = 0x4, offset = 0x4, fixed_abs, tag = 'smem constant byte address 0x4 - core index']
  #allocation1 [shape = 'u32[144,128]{1,0:T(1,128)}', space=vmem, size = 0x12000, scoped, tag = 'internal scratch']
  %s0 = inlined_call_operand.hbm [shape: f32[2,64,128], index: 0, kind: input, shape index: {}]
  %s1 = inlined_call_operand.hbm [shape: f32[2,128,128], index: 1, kind: input, shape index: {}]
  %s2 = inlined_call_operand.hbm [shape: f32[2,64,128], index: 2, kind: output, shape index: {}]
  %s3 = sld [smem:[#allocation0]]
  $region49: #{tpu_custom_call.1} parent=0
    _
  %s5 = ssub.s32 1, %s3
  %s6 = scalar_select 0, %s5, %s3
  $region1: #{tpu_custom_call.1} parent=0
    #allocation2 [shape = 'u8[65536]{0}', space=vmem, size = 0x10000, scoped, tag = 'input window, operand 0']
    #allocation3 [shape = 's32[2]{0}', space=sflag, size = 0x8, scoped, tag = 'scoped memory for tpu_custom_call.1']
    #allocation4 [shape = 's32[2]{0}', space=sflag, size = 0x8, scoped, tag = 'scoped memory for tpu_custom_call.1']
    #allocation5 [shape = 'u8[131072]{0}', space=vmem, size = 0x20000, scoped, tag = 'input window, operand 1']
    #allocation6 [shape = 's32[2]{0}', space=sflag, size = 0x8, scoped, tag = 'scoped memory for tpu_custom_call.1']
    #allocation7 [shape = 'u8[65536]{0}', space=vmem, size = 0x10000, scoped, tag = 'output window, operand 0']
    %7 = vsyncpa [#allocation3], 0
    %s8 = scalar_lea.sflag [#allocation3], 1
    %9 = vsyncpa %s8, 0
    %10 = vsyncpa [#allocation6], 0
    %s11 = scalar_lea.sflag [#allocation6], 1
    %12 = vsyncpa %s11, 0
    %13 = vsyncpa [#allocation4], 0
    %s14 = scalar_lea.sflag [#allocation4], 1
    %15 = vsyncpa %s14, 0
    loop: start=0, step=1, limit=4
    $region2: #{tpu_custom_call.1} parent=1 // loop_pre_header
      _
    $region3: #{tpu_custom_call.1} parent=1 // loop_header
      %s17 = sphi 0, %s21
      %p18 = scmp.ge.s32.totalorder %s17, 4
      %s24 = sphi 0, %s43
      %s25 = sphi 0, %s39
      %s26 = sphi 0, %s35
      %s27 = sphi 0, %s24
      %s28 = sphi 0, %s25
      %s29 = sphi 0, %s26
      %s30 = sphi 0, %s27
      %s31 = sphi 0, %s28
      %s32 = sphi 0, %s29
      %s48 = sphi 0, %s50
      %s51 = sphi 0, %s48
      %s52 = sphi 0, %s51
      %s68 = sphi 0, %s52
      %s76 = sphi 0, %s78
      %s79 = sphi 0, %s76
      %s80 = sphi 0, %s79
      %s96 = sphi 0, %s80
      %s106 = sphi 0, %s108
      %s109 = sphi 0, %s106
      %s110 = sphi 0, %s109
      %s126 = sphi 0, %s110
    $region4: #{tpu_custom_call.1} parent=1 // loop_header_branch
      %20 = sbr.rel (%p18) target = $region8
    $region5: #{tpu_custom_call.1} parent=1 // loop_body
      %s22 = ssub.s32 %s17, 1
      %s23 = ssub.s32 %s17, 2
      %s33 = sadd.s32 1, %s26
      %p34 = scmp.ge.s32.totalorder %s33, 1
      %s35 = scalar_select %p34, 0, %s33
      %s36 = sadd.s32 1, %s25
      %s37 = scalar_select %p34, %s36, %s25
      %p38 = scmp.ge.s32.totalorder %s37, 1
      %s39 = scalar_select %p38, 0, %s37
      %s40 = sadd.s32 1, %s24
      %s41 = scalar_select %p38, %s40, %s24
      %p42 = scmp.ge.s32.totalorder %s41, 2
      %s43 = scalar_select %p42, 0, %s41
      %s44 = ssub.s32 %s24, %s43
      %s45 = ssub.s32 %s25, %s39
      %s46 = sor.u32 %s44, %s45
      %p47 = scmp.eq.s32.totalorder %s46, 0
      %s49 = sadd.s32 %s48, 1
      %s50 = scalar_select %p47, %s48, %s49
      %p53 = pneg %p47
      %p54 = scmp.eq.s32.totalorder %s17, 1
      %p55 = por %p53, %p54
      %p56 = scmp.ne.s32.totalorder %s48, %s51
      %p57 = scmp.eq.s32.totalorder %s17, 0
      %p58 = por %p56, %p57
      %p59 = scmp.ne.s32.totalorder %s48, %s51
      %p60 = scmp.eq.s32.totalorder %s22, 1
      %p61 = por %p59, %p60
      %p62 = scmp.ne.s32.totalorder %s51, %s52
      %p63 = scmp.eq.s32.totalorder %s22, 0
      %p64 = por %p62, %p63
      %p65 = scmp.ne.s32.totalorder %s51, %s52
      %p66 = scmp.eq.s32.totalorder %s23, 1
      %p67 = por %p65, %p66
      %p69 = scmp.ne.s32.totalorder %s52, %s68
      %p70 = scmp.eq.s32.totalorder %s23, 0
      %p71 = por %p69, %p70
      %s72 = ssub.s32 %s24, %s43
      %s73 = ssub.s32 %s26, %s35
      %s74 = sor.u32 %s72, %s73
      %p75 = scmp.eq.s32.totalorder %s74, 0
      %s77 = sadd.s32 %s76, 1
      %s78 = scalar_select %p75, %s76, %s77
      %p81 = pneg %p75
      %p82 = scmp.eq.s32.totalorder %s17, 1
      %p83 = por %p81, %p82
      %p84 = scmp.ne.s32.totalorder %s76, %s79
      %p85 = scmp.eq.s32.totalorder %s17, 0
      %p86 = por %p84, %p85
      %p87 = scmp.ne.s32.totalorder %s76, %s79
      %p88 = scmp.eq.s32.totalorder %s22, 1
      %p89 = por %p87, %p88
      %p90 = scmp.ne.s32.totalorder %s79, %s80
      %p91 = scmp.eq.s32.totalorder %s22, 0
      %p92 = por %p90, %p91
      %p93 = scmp.ne.s32.totalorder %s79, %s80
      %p94 = scmp.eq.s32.totalorder %s23, 1
      %p95 = por %p93, %p94
      %p97 = scmp.ne.s32.totalorder %s80, %s96
      %p98 = scmp.eq.s32.totalorder %s23, 0
      %p99 = por %p97, %p98
      %s100 = ssub.s32 %s24, %s43
      %s101 = ssub.s32 %s25, %s39
      %s102 = sor.u32 %s100, %s101
      %s103 = ssub.s32 %s26, %s35
      %s104 = sor.u32 %s102, %s103
      %p105 = scmp.eq.s32.totalorder %s104, 0
      %s107 = sadd.s32 %s106, 1
      %s108 = scalar_select %p105, %s106, %s107
      %p111 = pneg %p105
      %p112 = scmp.eq.s32.totalorder %s17, 1
      %p113 = por %p111, %p112
      %p114 = scmp.ne.s32.totalorder %s106, %s109
      %p115 = scmp.eq.s32.totalorder %s17, 0
      %p116 = por %p114, %p115
      %p117 = scmp.ne.s32.totalorder %s106, %s109
      %p118 = scmp.eq.s32.totalorder %s22, 1
      %p119 = por %p117, %p118
      %p120 = scmp.ne.s32.totalorder %s109, %s110
      %p121 = scmp.eq.s32.totalorder %s22, 0
      %p122 = por %p120, %p121
      %p123 = scmp.ne.s32.totalorder %s109, %s110
      %p124 = scmp.eq.s32.totalorder %s23, 1
      %p125 = por %p123, %p124
      %p127 = scmp.ne.s32.totalorder %s110, %s126
      %p128 = scmp.eq.s32.totalorder %s23, 0
      %p129 = por %p127, %p128
      %p130 = scmp.le.s32.totalorder 1, %s17
      %p131 = scmp.lt.s32.totalorder %s17, 3
      %p132 = pnand %p130, %p131
      %p133 = pneg %p132
      // Predicated region
      $region9: #{tpu_custom_call.1} parent=5 // pred_check
        _
      $region10: #{tpu_custom_call.1} parent=5 // pred_check_branch
        %135 = sbr.rel (%p132) target = $region12
      $region11: #{tpu_custom_call.1} parent=5 // pred_region
        %s136 = ssub.s32 %s17, 1
      $region12: #{tpu_custom_call.1} parent=5 // pred_fallthru
        _
      %p137 = scmp.lt.s32.totalorder %s17, 2
      // Predicated region
      $region13: #{tpu_custom_call.1} parent=5 // pred_check
        %p138 = pneg %p137
      $region14: #{tpu_custom_call.1} parent=5 // pred_check_branch
        %140 = sbr.rel (%p138) target = $region16
      $region15: #{tpu_custom_call.1} parent=5 // pred_region
        // Predicated region
        $region17: #{tpu_custom_call.1} parent=15 // pred_check
          %p141 = pneg %p58
        $region18: #{tpu_custom_call.1} parent=15 // pred_check_branch
          %143 = sbr.rel (%p141) target = $region20
        $region19: #{tpu_custom_call.1} parent=15 // pred_region
          %s144 = sand.u32 %s48, 1
          %s145 = scalar_lea.sflag [#allocation3], %s144
          %s146 = sand.u32 %s48, 1
          %s147 = smul.addr %s146, 64
          %s148 = scalar_lea.vmem [#allocation2], %s147
          %s149 = smul.u32 8, %s25
          %s151 = ssub.s32 1024, 1024
          %152 = vsyncadd %s145, %s151
          %s153 = smul.addr %s24, 8
          %s154 = sadd.s32 %s149, %s153
          %s155 = smul.addr %s154, 128
          %s156 = scalar_lea.hbm %s0, %s155
          %s157 = sshll.u32 %s148, 4
          %s158 = int_to_ptr.vmem [resolvable:$true] %s157
          %163 = dma.hbm_to_vmem [thread:$0]  %s156, 1024, %s158, %s145, 128, 128, 8
        $region20: #{tpu_custom_call.1} parent=15 // pred_fallthru
          _
        // Predicated region
        $region21: #{tpu_custom_call.1} parent=15 // pred_check
          %p164 = pneg %p86
        $region22: #{tpu_custom_call.1} parent=15 // pred_check_branch
          %166 = sbr.rel (%p164) target = $region24
        $region23: #{tpu_custom_call.1} parent=15 // pred_region
          %s167 = sand.u32 %s76, 1
          %s168 = scalar_lea.sflag [#allocation6], %s167
          %s169 = sand.u32 %s76, 1
          %s170 = smul.addr %s169, 128
          %s171 = scalar_lea.vmem [#allocation5], %s170
          %s173 = ssub.s32 2048, 2048
          %174 = vsyncadd %s168, %s173
          %s175 = smul.addr %s24, 16
          %s176 = sadd.s32 %s26, %s175
          %s177 = smul.addr %s176, 128
          %s178 = scalar_lea.hbm %s1, %s177
          %s179 = sshll.u32 %s171, 4
          %s180 = int_to_ptr.vmem [resolvable:$true] %s179
          %185 = dma.hbm_to_vmem [thread:$0]  %s178, 2048, %s180, %s168, 128, 128, 8
        $region24: #{tpu_custom_call.1} parent=15 // pred_fallthru
          _
      $region16: #{tpu_custom_call.1} parent=5 // pred_fallthru
        _
      %p186 = scmp.le.s32.totalorder 1, %s17
      %p187 = scmp.lt.s32.totalorder %s17, 3
      %p188 = pnand %p186, %p187
      %p189 = pneg %p188
      // Predicated region
      $region25: #{tpu_custom_call.1} parent=5 // pred_check
        _
      $region26: #{tpu_custom_call.1} parent=5 // pred_check_branch
        %191 = sbr.rel (%p188) target = $region28
      $region27: #{tpu_custom_call.1} parent=5 // pred_region
        %s192 = ssub.s32 %s17, 1
        %s193 = sand.u32 %s51, 1
        %s194 = scalar_lea.sflag [#allocation3], %s193
        %s195 = sand.u32 %s51, 1
        %s196 = smul.addr %s195, 64
        %s197 = scalar_lea.vmem [#allocation2], %s196
        // Predicated region
        $region29: #{tpu_custom_call.1} parent=27 // pred_check
          %p198 = pneg %p64
        $region30: #{tpu_custom_call.1} parent=27 // pred_check_branch
          %200 = sbr.rel (%p198) target = $region32
        $region31: #{tpu_custom_call.1} parent=27 // pred_region
          %201 = dma.done %s194, 1024
        $region32: #{tpu_custom_call.1} parent=27 // pred_fallthru
          _
        %s202 = sand.u32 %s79, 1
        %s203 = scalar_lea.sflag [#allocation6], %s202
        %s204 = sand.u32 %s79, 1
        %s205 = smul.addr %s204, 128
        %s206 = scalar_lea.vmem [#allocation5], %s205
        // Predicated region
        $region33: #{tpu_custom_call.1} parent=27 // pred_check
          %p207 = pneg %p92
        $region34: #{tpu_custom_call.1} parent=27 // pred_check_branch
          %209 = sbr.rel (%p207) target = $region36
        $region35: #{tpu_custom_call.1} parent=27 // pred_region
          %210 = dma.done %s203, 2048
        $region36: #{tpu_custom_call.1} parent=27 // pred_fallthru
          _
        %s211 = sand.u32 %s51, 1
        %s212 = scalar_lea.sflag [#allocation3], %s211
        %s213 = sand.u32 %s51, 1
        %s214 = smul.addr %s213, 64
        %s215 = scalar_lea.vmem [#allocation2], %s214
        %p216 = pneg %p64
        %p217 = pneg %p61
        %s218 = sand.u32 %s79, 1
        %s219 = scalar_lea.sflag [#allocation6], %s218
        %s220 = sand.u32 %s79, 1
        %s221 = smul.addr %s220, 128
        %s222 = scalar_lea.vmem [#allocation5], %s221
        %p223 = pneg %p92
        %p224 = pneg %p89
        %p225 = pneg %p122
        %p226 = pneg %p119
        %s227 = sand.u32 %s109, 1
        %s228 = scalar_lea.sflag [#allocation4], %s227
        %s229 = sand.u32 %s109, 1
        %s230 = smul.addr %s229, 64
        %s231 = scalar_lea.vmem [#allocation7], %s230
        %s232 = smul.u32 8, %s28
        %s233 = smul.u32 8, %s28
        %v234 = vld [vmem:[%s197] sm:$0xff]
        %v235 = vld [vmem:[%s197 + $0x8] sm:$0xff]
        %v236 = vld [vmem:[%s197 + $0x10] sm:$0xff]
        %v237 = vld [vmem:[%s197 + $0x18] sm:$0xff]
        %v238 = vld [vmem:[%s197 + $0x20] sm:$0xff]
        %v239 = vld [vmem:[%s197 + $0x28] sm:$0xff]
        %v240 = vld [vmem:[%s197 + $0x30] sm:$0xff]
        %v241 = vld [vmem:[%s197 + $0x38] sm:$0xff]
        %v242 = vld [vmem:[%s206] sm:$0xff]
        %v243 = vld [vmem:[%s206 + $0x8] sm:$0xff]
        %v244 = vld [vmem:[%s206 + $0x10] sm:$0xff]
        %v245 = vld [vmem:[%s206 + $0x18] sm:$0xff]
        %v246 = vld [vmem:[%s206 + $0x20] sm:$0xff]
        %v247 = vld [vmem:[%s206 + $0x28] sm:$0xff]
        %v248 = vld [vmem:[%s206 + $0x30] sm:$0xff]
        %v249 = vld [vmem:[%s206 + $0x38] sm:$0xff]
        %v250 = vld [vmem:[%s206 + $0x40] sm:$0xff]
        %v251 = vld [vmem:[%s206 + $0x48] sm:$0xff]
        %v252 = vld [vmem:[%s206 + $0x50] sm:$0xff]
        %v253 = vld [vmem:[%s206 + $0x58] sm:$0xff]
        %v254 = vld [vmem:[%s206 + $0x60] sm:$0xff]
        %v255 = vld [vmem:[%s206 + $0x68] sm:$0xff]
        %v256 = vld [vmem:[%s206 + $0x70] sm:$0xff]
        %v257 = vld [vmem:[%s206 + $0x78] sm:$0xff]
        %258 = vmatprep.subr.mxu0 0.0
        %259 = vmatpush1.msra.mxu0 %v242
        %260 = vmatprep.subr.mxu0 0.0
        %261 = vmatpush1.msra.mxu0 %v243
        %262 = vmatprep.subr.mxu0 0.0
        %263 = vmatpush1.msra.mxu0 %v244
        %264 = vmatprep.subr.mxu0 0.0
        %265 = vmatpush1.msra.mxu0 %v245
        %266 = vmatprep.subr.mxu0 0.0
        %267 = vmatpush1.msra.mxu0 %v246
        %268 = vmatprep.subr.mxu0 0.0
        %269 = vmatpush1.msra.mxu0 %v247
        %270 = vmatprep.subr.mxu0 0.0
        %271 = vmatpush1.msra.mxu0 %v248
        %272 = vmatprep.subr.mxu0 0.0
        %273 = vmatpush1.msra.mxu0 %v249
        %274 = vmatprep.subr.mxu0 0.0
        %275 = vmatpush1.msra.mxu0 %v250
        %276 = vmatprep.subr.mxu0 0.0
        %277 = vmatpush1.msra.mxu0 %v251
        %278 = vmatprep.subr.mxu0 0.0
        %279 = vmatpush1.msra.mxu0 %v252
        %280 = vmatprep.subr.mxu0 0.0
        %281 = vmatpush1.msra.mxu0 %v253
        %282 = vmatprep.subr.mxu0 0.0
        %283 = vmatpush1.msra.mxu0 %v254
        %284 = vmatprep.subr.mxu0 0.0
        %285 = vmatpush1.msra.mxu0 %v255
        %286 = vmatprep.subr.mxu0 0.0
        %287 = vmatpush1.msra.mxu0 %v256
        %288 = vmatprep.subr.mxu0 0.0
        %289 = vmatpush1.msra.mxu0 %v257
        %290 = vmatprep.subr.mxu0 0.0
        %291 = vmatpush1.msra.mxu0 0.0
        %292 = vmatprep.subr.mxu0 0.0
        %293 = vmatpush1.msra.mxu0 0.0
        %294 = vmatprep.subr.mxu0 0.0
        %295 = vmatpush1.msra.mxu0 0.0
        %296 = vmatprep.subr.mxu0 0.0
        %297 = vmatpush1.msra.mxu0 0.0
        %298 = vmatprep.subr.mxu0 0.0
        %299 = vmatpush1.msra.mxu0 0.0
        %300 = vmatprep.subr.mxu0 0.0
        %301 = vmatpush1.msra.mxu0 0.0
        %302 = vmatprep.subr.mxu0 0.0
        %303 = vmatpush1.msra.mxu0 0.0
        %304 = vmatprep.subr.mxu0 0.0
        %305 = vmatpush1.msra.mxu0 0.0
        %306 = vmatprep.subr.mxu0 0.0
        %307 = vmatpush1.msra.mxu0 0.0
        %308 = vmatprep.subr.mxu0 0.0
        %309 = vmatpush1.msra.mxu0 0.0
        %310 = vmatprep.subr.mxu0 0.0
        %311 = vmatpush1.msra.mxu0 0.0
        %312 = vmatprep.subr.mxu0 0.0
        %313 = vmatpush1.msra.mxu0 0.0
        %314 = vmatprep.subr.mxu0 0.0
        %315 = vmatpush1.msra.mxu0 0.0
        %316 = vmatprep.subr.mxu0 0.0
        %317 = vmatpush1.msra.mxu0 0.0
        %318 = vmatprep.subr.mxu0 0.0
        %319 = vmatpush1.msra.mxu0 0.0
        %320 = vmatprep.subr.mxu0 0.0
        %321 = vmatpush1.msra.mxu0 0.0
        %322 = vmatprep.mubr.f32.mxu0 0.0
        %323 = vmatmul.mubr.f32.gmra.mrb[0].mxu0 %v234
        %v324 = vpop.f32.mrb[0].mxu0
        %v325 = vadd.f32 0.0, %v324
        %v326 = vpop.f32.mrb[0].mxu0
        %327 = vmatprep.mubr.f32.mxu0 0.0
        %328 = vmatmul.mubr.f32.gmra.mrb[0].mxu0 %v235
        %v329 = vpop.f32.mrb[0].mxu0
        %v330 = vadd.f32 0.0, %v329
        %v331 = vpop.f32.mrb[0].mxu0
        %332 = vmatprep.mubr.f32.mxu0 0.0
        %333 = vmatmul.mubr.f32.gmra.mrb[0].mxu0 %v236
        %v334 = vpop.f32.mrb[0].mxu0
        %v335 = vadd.f32 0.0, %v334
        %v336 = vpop.f32.mrb[0].mxu0
        %337 = vmatprep.mubr.f32.mxu0 0.0
        %338 = vmatmul.mubr.f32.gmra.mrb[0].mxu0 %v237
        %v339 = vpop.f32.mrb[0].mxu0
        %v340 = vadd.f32 0.0, %v339
        %v341 = vpop.f32.mrb[0].mxu0
        %342 = vmatprep.mubr.f32.mxu0 0.0
        %343 = vmatmul.mubr.f32.gmra.mrb[0].mxu0 %v238
        %v344 = vpop.f32.mrb[0].mxu0
        %v345 = vadd.f32 0.0, %v344
        %v346 = vpop.f32.mrb[0].mxu0
        %347 = vmatprep.mubr.f32.mxu0 0.0
        %348 = vmatmul.mubr.f32.gmra.mrb[0].mxu0 %v239
        %v349 = vpop.f32.mrb[0].mxu0
        %v350 = vadd.f32 0.0, %v349
        %v351 = vpop.f32.mrb[0].mxu0
        %352 = vmatprep.mubr.f32.mxu0 0.0
        %353 = vmatmul.mubr.f32.gmra.mrb[0].mxu0 %v240
        %v354 = vpop.f32.mrb[0].mxu0
        %v355 = vadd.f32 0.0, %v354
        %v356 = vpop.f32.mrb[0].mxu0
        %357 = vmatprep.mubr.f32.mxu0 0.0
        %358 = vmatmul.mubr.f32.gmra.mrb[0].mxu0 %v241
        %v359 = vpop.f32.mrb[0].mxu0
        %v360 = vadd.f32 0.0, %v359
        %v361 = vpop.f32.mrb[0].mxu0
        %362 = vdwg.mxu0
        %363 = vst [vmem:[%s231] sm:$0xff] %v325
        %364 = vst [vmem:[%s231 + $0x8] sm:$0xff] %v330
        %365 = vst [vmem:[%s231 + $0x10] sm:$0xff] %v335
        %366 = vst [vmem:[%s231 + $0x18] sm:$0xff] %v340
        %367 = vst [vmem:[%s231 + $0x20] sm:$0xff] %v345
        %368 = vst [vmem:[%s231 + $0x28] sm:$0xff] %v350
        %369 = vst [vmem:[%s231 + $0x30] sm:$0xff] %v355
        %370 = vst [vmem:[%s231 + $0x38] sm:$0xff] %v360
        %s371 = sand.u32 %s109, 1
        %s372 = scalar_lea.sflag [#allocation4], %s371
        %s373 = sand.u32 %s109, 1
        %s374 = smul.addr %s373, 64
        %s375 = scalar_lea.vmem [#allocation7], %s374
        // Predicated region
        $region37: #{tpu_custom_call.1} parent=27 // pred_check
          %p376 = pneg %p119
        $region38: #{tpu_custom_call.1} parent=27 // pred_check_branch
          %378 = sbr.rel (%p376) target = $region40
        $region39: #{tpu_custom_call.1} parent=27 // pred_region
          %s379 = smul.u32 8, %s28
          %s381 = ssub.s32 1024, 1024
          %382 = vsyncadd %s372, %s381
          %s383 = sadd.s32 %s29, %s379
          %s384 = smul.addr %s27, 8
          %s385 = sadd.s32 %s383, %s384
          %s386 = smul.addr %s385, 128
          %s387 = scalar_lea.hbm %s2, %s386
          %s388 = sshll.u32 %s375, 4
          %s389 = int_to_ptr.vmem [resolvable:$true] %s388
          %394 = dma.vmem_to_hbm [thread:$0]  %s389, 1024, %s387, %s372, 128, 128, 8
        $region40: #{tpu_custom_call.1} parent=27 // pred_fallthru
          _
      $region28: #{tpu_custom_call.1} parent=5 // pred_fallthru
        _
      %p395 = scmp.le.s32.totalorder 2, %s17
      // Predicated region
      $region41: #{tpu_custom_call.1} parent=5 // pred_check
        %p396 = pneg %p395
      $region42: #{tpu_custom_call.1} parent=5 // pred_check_branch
        %398 = sbr.rel (%p396) target = $region44
      $region43: #{tpu_custom_call.1} parent=5 // pred_region
        %s399 = ssub.s32 %s17, 2
        // Predicated region
        $region45: #{tpu_custom_call.1} parent=43 // pred_check
          %p400 = pneg %p125
        $region46: #{tpu_custom_call.1} parent=43 // pred_check_branch
          %402 = sbr.rel (%p400) target = $region48
        $region47: #{tpu_custom_call.1} parent=43 // pred_region
          %s403 = sand.u32 %s110, 1
          %s404 = scalar_lea.sflag [#allocation4], %s403
          %s405 = sand.u32 %s110, 1
          %s406 = smul.addr %s405, 64
          %s407 = scalar_lea.vmem [#allocation7], %s406
          %408 = dma.done %s404, 1024
        $region48: #{tpu_custom_call.1} parent=43 // pred_fallthru
          _
      $region44: #{tpu_custom_call.1} parent=5 // pred_fallthru
        _
    $region6: #{tpu_custom_call.1} parent=1 // loop_footer
      %s21 = sadd.s32 1, %s17
    $region7: #{tpu_custom_call.1} parent=1 // loop_footer_branch
      %16 = sbr.rel target = $region3
    $region8: #{tpu_custom_call.1} parent=1 // loop_exit
      _
    %409 = vsyncpa [#allocation3], 1
    %s410 = scalar_lea.sflag [#allocation3], 1
    %411 = vsyncpa %s410, 1
    %412 = vsyncpa [#allocation6], 1
    %s413 = scalar_lea.sflag [#allocation6], 1
    %414 = vsyncpa %s413, 1
    %415 = vsyncpa [#allocation4], 1
    %s416 = scalar_lea.sflag [#allocation4], 1
    %417 = vsyncpa %s416, 1

</llo_original>
